<compile_context>
chip_gen: v7x
topology: tpu7x:2x2x1
jax: 0.10.0
libtpu: 0.0.40
codegen_flags: <defaults>
</compile_context>

<pallas_src>
import functools

import jax
import jax.numpy as jnp
import numpy as np
from jax.experimental import pallas as pl
from jax.experimental.pallas import tpu as pltpu


# ----------------------------------------------------------------------------
# Small helpers.
# ----------------------------------------------------------------------------
def _round_up(n, m):
    return ((n + m - 1) // m) * m


def _pad2d(a, rows, cols):
    r, c = a.shape
    if r == rows and c == cols:
        return a
    return jnp.pad(a, ((0, rows - r), (0, cols - c)))


# ----------------------------------------------------------------------------
# Standalone LayerNorm kernel: rows normalized independently over the last axis.
# Used for the context branch and for arbitrary (non-fusable) `fn`s.
# ----------------------------------------------------------------------------
def _layernorm_kernel(x_ref, g_ref, b_ref, o_ref, *, eps):
    x = x_ref[...].astype(jnp.float32)                       # (tile_rows, D)
    mean = jnp.mean(x, axis=-1, keepdims=True)
    mean_sq = jnp.mean(x * x, axis=-1, keepdims=True)        # one-pass variance
    var = mean_sq - mean * mean
    inv = jax.lax.rsqrt(var + eps)
    o_ref[...] = ((x - mean) * inv * g_ref[...] + b_ref[...]).astype(o_ref.dtype)


def layernorm(x, gamma, beta, *, eps=1e-5, max_tile_rows=1024,
              vmem_budget_bytes=8 * 1024 * 1024):
    """LayerNorm over the last axis of `x` (any leading dims)."""
    orig_shape = x.shape
    D = orig_shape[-1]
    x2 = x.reshape(-1, D)
    R = x2.shape[0]

    # Largest row tile (multiple of 8) that keeps input+output double-buffers
    # within the VMEM budget.  LayerNorm is HBM-bound, so bigger tiles amortize
    # the per-grid-step overhead; the budget keeps v7x's 64 MiB VMEM safe.
    bytes_per_row = 2 * 2 * D * 4                 # (in + out) x 2 buffers, f32
    tile_rows = max(8, min(max_tile_rows, vmem_budget_bytes // max(bytes_per_row, 1)))
    tile_rows = max(8, (tile_rows // 8) * 8)
    tile_rows = min(tile_rows, _round_up(R, 8))

    Rp = _round_up(R, tile_rows)
    x2p = _pad2d(x2, Rp, D)                       # never pad D: it is the norm axis
    g2 = gamma.reshape(1, D).astype(jnp.float32)  # pre-cast once (grid-invariant)
    b2 = beta.reshape(1, D).astype(jnp.float32)

    out = pl.pallas_call(
        functools.partial(_layernorm_kernel, eps=eps),
        out_shape=jax.ShapeDtypeStruct((Rp, D), x.dtype),
        grid_spec=pltpu.PrefetchScalarGridSpec(
            num_scalar_prefetch=0,
            grid=(Rp // tile_rows,),
            in_specs=[
                pl.BlockSpec((tile_rows, D), lambda i: (i, 0)),
                pl.BlockSpec((1, D), lambda i: (0, 0)),
                pl.BlockSpec((1, D), lambda i: (0, 0)),
            ],
            out_specs=pl.BlockSpec((tile_rows, D), lambda i: (i, 0)),
        ),
        compiler_params=pltpu.CompilerParams(
            dimension_semantics=("parallel",)),
    )(x2p, g2, b2)
    return out[:R].reshape(orig_shape)


# ----------------------------------------------------------------------------
# Tiled linear kernel (matmul + bias) with f32 VMEM accumulator.
# ----------------------------------------------------------------------------
def _linear_kernel(x_ref, w_ref, b_ref, o_ref, acc_ref):
    k = pl.program_id(2)

    @pl.when(k == 0)
    def _():
        acc_ref[...] = jnp.zeros_like(acc_ref)

    acc_ref[...] += jnp.dot(x_ref[...], w_ref[...],
                            preferred_element_type=jnp.float32)

    @pl.when(k == pl.num_programs(2) - 1)
    def _():
        o_ref[...] = (acc_ref[...] + b_ref[...].astype(jnp.float32)).astype(o_ref.dtype)


def linear(x2d, w, b, *, tm=256, tn=256, tk=512):
    """x2d: (M, K), w: (K, N), b: (N,) -> (M, N). Tiled, pipelined matmul."""
    M, K = x2d.shape
    Kw, N = w.shape
    assert K == Kw

    tm = min(tm, _round_up(M, 8))
    tn = min(tn, _round_up(N, 128))
    tk = min(tk, _round_up(K, 128))
    Mp, Kp, Np = _round_up(M, tm), _round_up(K, tk), _round_up(N, tn)

    xp = _pad2d(x2d, Mp, Kp)
    wp = _pad2d(w, Kp, Np)
    bp = _pad2d(b.reshape(1, N), 1, Np)

    out = pl.pallas_call(
        _linear_kernel,
        out_shape=jax.ShapeDtypeStruct((Mp, Np), x2d.dtype),
        grid_spec=pltpu.PrefetchScalarGridSpec(
            num_scalar_prefetch=0,
            grid=(Mp // tm, Np // tn, Kp // tk),
            in_specs=[
                pl.BlockSpec((tm, tk), lambda i, j, k: (i, k)),
                pl.BlockSpec((tk, tn), lambda i, j, k: (k, j)),
                pl.BlockSpec((1, tn), lambda i, j, k: (0, j)),
            ],
            out_specs=pl.BlockSpec((tm, tn), lambda i, j, k: (i, j)),
            scratch_shapes=[pltpu.VMEM((tm, tn), jnp.float32)],
        ),
        compiler_params=pltpu.CompilerParams(
            dimension_semantics=("parallel", "parallel", "arbitrary")),
    )(xp, wp, bp)
    return out[:M, :N]


# ----------------------------------------------------------------------------
# Fused LayerNorm + Linear kernel: normalize the x tile in registers and feed
# it straight into the MXU -- the normalized activation never touches HBM.
# The normalized axis D is kept whole per block (required for mean/var).
# ----------------------------------------------------------------------------
def _ln_linear_kernel(x_ref, g_ref, b_ref, w_ref, bias_ref, o_ref, *, eps):
    x = x_ref[...].astype(jnp.float32)                       # (tm, D)
    mean = jnp.mean(x, axis=-1, keepdims=True)
    mean_sq = jnp.mean(x * x, axis=-1, keepdims=True)
    var = mean_sq - mean * mean
    inv = jax.lax.rsqrt(var + eps)
    xn = (x - mean) * inv * g_ref[...] + b_ref[...]
    acc = jnp.dot(xn.astype(w_ref.dtype), w_ref[...],
                  preferred_element_type=jnp.float32)
    o_ref[...] = (acc + bias_ref[...].astype(jnp.float32)).astype(o_ref.dtype)


def layernorm_linear(x2d, gamma, beta, w, b, *, eps=1e-5, tm=256, tn=256,
                     vmem_budget_bytes=12 * 1024 * 1024):
    """(LayerNorm(x2d) * gamma + beta) @ w + b, fused in one kernel.

    x2d: (M, D), w: (D, N), b: (N,) -> (M, N).
    """
    M, D = x2d.shape
    Dw, N = w.shape
    assert D == Dw

    tn = min(tn, _round_up(N, 128))
    # Budget: x tile (tm, D) + out tile (tm, tn), double-buffered, f32.
    bytes_per_row = 2 * 4 * (D + tn)
    tm = min(tm, max(8, vmem_budget_bytes // max(bytes_per_row, 1)))
    tm = max(8, (tm // 8) * 8)
    tm = min(tm, _round_up(M, 8))
    Mp, Np = _round_up(M, tm), _round_up(N, tn)

    xp = _pad2d(x2d, Mp, D)                       # never pad D (norm axis)
    wp = _pad2d(w, D, Np)
    bp = _pad2d(b.reshape(1, N), 1, Np)
    g2 = gamma.reshape(1, D).astype(jnp.float32)
    b2 = beta.reshape(1, D).astype(jnp.float32)

    out = pl.pallas_call(
        functools.partial(_ln_linear_kernel, eps=eps),
        out_shape=jax.ShapeDtypeStruct((Mp, Np), x2d.dtype),
        grid_spec=pltpu.PrefetchScalarGridSpec(
            num_scalar_prefetch=0,
            grid=(Mp // tm, Np // tn),
            in_specs=[
                pl.BlockSpec((tm, D), lambda i, j: (i, 0)),
                pl.BlockSpec((1, D), lambda i, j: (0, 0)),
                pl.BlockSpec((1, D), lambda i, j: (0, 0)),
                pl.BlockSpec((D, tn), lambda i, j: (0, j)),
                pl.BlockSpec((1, tn), lambda i, j: (0, j)),
            ],
            out_specs=pl.BlockSpec((tm, tn), lambda i, j: (i, j)),
        ),
        compiler_params=pltpu.CompilerParams(
            dimension_semantics=("parallel", "parallel")),
    )(xp, g2, b2, wp, bp)
    return out[:M, :N]


# ----------------------------------------------------------------------------
# PreNorm wrapper (mirrors the PyTorch module).
# ----------------------------------------------------------------------------
class PreNorm:
    def __init__(self, dim, fn, context_dim=None, eps=1e-5):
        self.fn = fn
        self.dim = dim
        self.context_dim = context_dim
        self.eps = eps
        # nn.LayerNorm default init: weight=1, bias=0
        self.g = jnp.ones((dim,), jnp.float32)
        self.b = jnp.zeros((dim,), jnp.float32)
        if context_dim is not None:
            self.g_ctx = jnp.ones((context_dim,), jnp.float32)
            self.b_ctx = jnp.zeros((context_dim,), jnp.float32)
        else:
            self.g_ctx = self.b_ctx = None

    def __call__(self, x, **kwargs):
        if self.context_dim is not None:
            context = kwargs["context"]
            kwargs.update(
                context=layernorm(context, self.g_ctx, self.b_ctx, eps=self.eps))
        if hasattr(self.fn, "fused_prenorm_call"):
            # Fused path: fold this module's x-LayerNorm into fn's first matmul
            # (no HBM round-trip of the normalized activation).
            return self.fn.fused_prenorm_call(x, self.g, self.b, self.eps, **kwargs)
        # Generic path for arbitrary fn (matches the torch module exactly).
        return self.fn(layernorm(x, self.g, self.b, eps=self.eps), **kwargs)


# ----------------------------------------------------------------------------
# Demo `fn` wrapped by PreNorm: Linear(x) + mean_over_ctx_seq(Linear(context)).
# Exposes a fused hook so PreNorm can fuse LN(x) into the x-matmul.
# ----------------------------------------------------------------------------
class CrossMixFn:
    def __init__(self, Wx, bx, Wc, bc):
        self.Wx, self.bx, self.Wc, self.bc = Wx, bx, Wc, bc

    def _mix(self, y, context):
        Bc, Sc, _ = context.shape
        c = linear(context.reshape(-1, self.Wc.shape[0]), self.Wc, self.bc)
        c = c.reshape(Bc, Sc, -1)
        return y + jnp.mean(c, axis=1, keepdims=True)

    def __call__(self, x_normed, context=None):
        B, S, D = x_normed.shape
        y = linear(x_normed.reshape(-1, D), self.Wx, self.bx).reshape(B, S, -1)
        return self._mix(y, context)

    def fused_prenorm_call(self, x_raw, g, b, eps, context=None):
        B, S, D = x_raw.shape
        y = layernorm_linear(x_raw.reshape(-1, D), g, b, self.Wx, self.bx, eps=eps)
        return self._mix(y.reshape(B, S, -1), context)


if __name__ == "__main__":
    key = jax.random.PRNGKey(0)
    k_x, k_c, k_wx, k_wc, k_g, k_b, k_gc, k_bc = jax.random.split(key, 8)

    B, S, D = 2, 8, 32          # x: (batch, seq, dim)
    Sc, Dc = 8, 48              # context: (batch, ctx_seq, context_dim)
    Dout = 32

    x = jax.random.normal(k_x, (B, S, D), jnp.float32)
    context = jax.random.normal(k_c, (B, Sc, Dc), jnp.float32)

    # Deterministic params for the wrapped fn (a small cross-mixing linear).
    Wx = jax.random.normal(k_wx, (D, Dout), jnp.float32) * 0.05
    bx = jnp.zeros((Dout,), jnp.float32)
    Wc = jax.random.normal(k_wc, (Dc, Dout), jnp.float32) * 0.05
    bc = jnp.zeros((Dout,), jnp.float32)

    fn = CrossMixFn(Wx, bx, Wc, bc)
    prenorm = PreNorm(D, fn, context_dim=Dc)

    # Non-trivial affine params (same formula as nn.LayerNorm; default init 1/0).
    prenorm.g = 1.0 + 0.1 * jax.random.normal(k_g, (D,), jnp.float32)
    prenorm.b = 0.1 * jax.random.normal(k_b, (D,), jnp.float32)
    prenorm.g_ctx = 1.0 + 0.1 * jax.random.normal(k_gc, (Dc,), jnp.float32)
    prenorm.b_ctx = 0.1 * jax.random.normal(k_bc, (Dc,), jnp.float32)

    # Fused path (what PreNorm.__call__ picks for this fn).
    out = prenorm(x, context=context)
    out = jax.block_until_ready(out)

    # Generic path (standalone LN kernel + tiled linear) for cross-checking.
    out_generic = fn(layernorm(x, prenorm.g, prenorm.b),
                     context=layernorm(context, prenorm.g_ctx, prenorm.b_ctx))
    out_generic = jax.block_until_ready(out_generic)

    # Pure-JAX reference of the PreNorm semantics.
    def ln_ref(v, g, b, eps=1e-5):
        m = jnp.mean(v, axis=-1, keepdims=True)
        var = jnp.mean((v - m) ** 2, axis=-1, keepdims=True)
        return (v - m) * jax.lax.rsqrt(var + eps) * g + b

    x_n = ln_ref(x, prenorm.g, prenorm.b)
    c_n = ln_ref(context, prenorm.g_ctx, prenorm.b_ctx)
    ref = (x_n @ Wx + bx) + jnp.mean(c_n @ Wc + bc, axis=1, keepdims=True)

    np.testing.assert_allclose(np.asarray(out), np.asarray(ref), atol=1e-4, rtol=1e-4)
    np.testing.assert_allclose(np.asarray(out_generic), np.asarray(ref),
                               atol=1e-4, rtol=1e-4)

    print("KERNEL_OK")
</pallas_src>

<mosaic_0001>
module attributes {stable_mosaic.version = 11 : i64} {
  func.func @_layernorm_kernel(%arg0: i32, %arg1: memref<16x48xf32, #tpu.memory_space<vmem>>, %arg2: memref<1x48xf32, #tpu.memory_space<vmem>>, %arg3: memref<1x48xf32, #tpu.memory_space<vmem>>, %arg4: memref<16x48xf32, #tpu.memory_space<vmem>>) attributes {dimension_semantics = [#tpu.dimension_semantics<parallel>], iteration_bounds = array<i64: 1>, scalar_prefetch = 0 : i64, scratch_operands = 0 : i64, tpu.core_type = #tpu.core_type<tc>, window_params = [{transform_indices = @transform_0, window_bounds = array<i64: 16, 48>}, {pipeline_mode = #tpu.pipeline_mode<synchronous>, transform_indices = @transform_1, window_bounds = array<i64: 1, 48>}, {pipeline_mode = #tpu.pipeline_mode<synchronous>, transform_indices = @transform_2, window_bounds = array<i64: 1, 48>}, {transform_indices = @transform_3, window_bounds = array<i64: 16, 48>}]} {
    %c0 = arith.constant 0 : index
    %c0_0 = arith.constant 0 : index
    %0 = vector.load %arg1[%c0, %c0_0] : memref<16x48xf32, #tpu.memory_space<vmem>>, vector<16x48xf32>
    %cst = arith.constant dense<0.000000e+00> : vector<16xf32>
    %1 = vector.multi_reduction <add>, %0, %cst [1] : vector<16x48xf32> to vector<16xf32>
    %2 = vector.shape_cast %1 : vector<16xf32> to vector<16x1xf32>
    %cst_1 = arith.constant 4.800000e+01 : f32
    %3 = vector.broadcast %cst_1 : f32 to vector<16x1xf32>
    %4 = arith.divf %2, %3 : vector<16x1xf32>
    %5 = arith.mulf %0, %0 : vector<16x48xf32>
    %cst_2 = arith.constant dense<0.000000e+00> : vector<16xf32>
    %6 = vector.multi_reduction <add>, %5, %cst_2 [1] : vector<16x48xf32> to vector<16xf32>
    %7 = vector.shape_cast %6 : vector<16xf32> to vector<16x1xf32>
    %cst_3 = arith.constant 4.800000e+01 : f32
    %8 = vector.broadcast %cst_3 : f32 to vector<16x1xf32>
    %9 = arith.divf %7, %8 : vector<16x1xf32>
    %10 = arith.mulf %4, %4 : vector<16x1xf32>
    %11 = arith.subf %9, %10 : vector<16x1xf32>
    %cst_4 = arith.constant 9.99999974E-6 : f32
    %12 = vector.broadcast %cst_4 : f32 to vector<16x1xf32>
    %13 = arith.addf %11, %12 : vector<16x1xf32>
    %14 = math.rsqrt %13 : vector<16x1xf32>
    %15 = vector.broadcast %4 : vector<16x1xf32> to vector<16x48xf32>
    %16 = arith.subf %0, %15 : vector<16x48xf32>
    %17 = vector.broadcast %14 : vector<16x1xf32> to vector<16x48xf32>
    %18 = arith.mulf %16, %17 : vector<16x48xf32>
    %c0_5 = arith.constant 0 : index
    %c0_6 = arith.constant 0 : index
    %19 = vector.load %arg2[%c0_5, %c0_6] : memref<1x48xf32, #tpu.memory_space<vmem>>, vector<1x48xf32>
    %20 = vector.broadcast %19 : vector<1x48xf32> to vector<16x48xf32>
    %21 = arith.mulf %18, %20 : vector<16x48xf32>
    %c0_7 = arith.constant 0 : index
    %c0_8 = arith.constant 0 : index
    %22 = vector.load %arg3[%c0_7, %c0_8] : memref<1x48xf32, #tpu.memory_space<vmem>>, vector<1x48xf32>
    %23 = vector.broadcast %22 : vector<1x48xf32> to vector<16x48xf32>
    %24 = arith.addf %21, %23 : vector<16x48xf32>
    %c0_9 = arith.constant 0 : index
    %c0_10 = arith.constant 0 : index
    %25 = vector.load %arg4[%c0_9, %c0_10] : memref<16x48xf32, #tpu.memory_space<vmem>>, vector<16x48xf32>
    tpu.vector_store %arg4[%c0_9, %c0_10], %24 {strides = array<i32>} : memref<16x48xf32, #tpu.memory_space<vmem>>, vector<16x48xf32>,
    return
  }
  func.func @transform_0(%arg0: i32) -> (i32, i32) {
    %c0_i32 = arith.constant 0 : i32
    %c0_i32_0 = arith.constant 0 : i32
    return %arg0, %c0_i32 : i32, i32
  }
  func.func @transform_1(%arg0: i32) -> (i32, i32) {
    %c0_i32 = arith.constant 0 : i32
    %c0_i32_0 = arith.constant 0 : i32
    %c0_i32_1 = arith.constant 0 : i32
    return %c0_i32, %c0_i32_0 : i32, i32
  }
  func.func @transform_2(%arg0: i32) -> (i32, i32) {
    %c0_i32 = arith.constant 0 : i32
    %c0_i32_0 = arith.constant 0 : i32
    %c0_i32_1 = arith.constant 0 : i32
    return %c0_i32, %c0_i32_0 : i32, i32
  }
  func.func @transform_3(%arg0: i32) -> (i32, i32) {
    %c0_i32 = arith.constant 0 : i32
    %c0_i32_0 = arith.constant 0 : i32
    return %arg0, %c0_i32 : i32, i32
  }
}

</mosaic_0001>

<llo_original>
// kernel: tpu_custom_call.1
$region0: #{tpu_custom_call.1}
  #allocation0 [shape = 'u32[]', space=smem, size = 0x4, offset = 0x4, fixed_abs, tag = 'smem constant byte address 0x4 - core index']
  #allocation1 [shape = 'u32[144,128]{1,0:T(1,128)}', space=vmem, size = 0x12000, scoped, tag = 'internal scratch']
  %s0 = inlined_call_operand.hbm [shape: f32[16,48], index: 0, kind: input, shape index: {}]
  %s1 = inlined_call_operand.vmem [shape: f32[1,48], index: 1, kind: input, shape index: {}]
  %s2 = inlined_call_operand.vmem [shape: f32[1,48], index: 2, kind: input, shape index: {}]
  %s3 = inlined_call_operand.hbm [shape: f32[16,48], index: 3, kind: output, shape index: {}]
  %s4 = sld [smem:[#allocation0]]
  $region26: #{tpu_custom_call.1} parent=0
    _
  %s6 = ssub.s32 1, %s4
  %s7 = scalar_select 0, %s6, %s4
  $region1: #{tpu_custom_call.1} parent=0
    #allocation2 [shape = 'u8[8192]{0}', space=vmem, size = 0x2000, scoped, tag = 'input window, operand 0, single buffered']
    #allocation3 [shape = 's32[1]{0}', space=sflag, size = 0x4, scoped, tag = 'scoped memory for tpu_custom_call.1']
    #allocation4 [shape = 's32[1]{0}', space=sflag, size = 0x4, scoped, tag = 'scoped memory for tpu_custom_call.1']
    #allocation5 [shape = 'u8[8192]{0}', space=vmem, size = 0x2000, scoped, tag = 'output window, operand 0, single buffered']
    %8 = vsyncpa [#allocation3], 0
    %9 = vsyncpa [#allocation4], 0
    // Predicated region
    $region2: #{tpu_custom_call.1} parent=1 // pred_check
      _
    $region3: #{tpu_custom_call.1} parent=1 // pred_check_branch
      %11 = sbr.rel (0) target = $region5
    $region4: #{tpu_custom_call.1} parent=1 // pred_region
      %s13 = ssub.s32 256, 256
      %14 = vsyncadd [#allocation3], %s13
      %s15 = sshll.u32 [#allocation2], 4
      %s16 = int_to_ptr.vmem [resolvable:$true] %s15
      %21 = dma.hbm_to_vmem [thread:$0]  %s0, 256, %s16, [#allocation3], 128, 128, 8
    $region5: #{tpu_custom_call.1} parent=1 // pred_fallthru
      _
    // Predicated region
    $region6: #{tpu_custom_call.1} parent=1 // pred_check
      _
    $region7: #{tpu_custom_call.1} parent=1 // pred_check_branch
      %23 = sbr.rel (0) target = $region9
    $region8: #{tpu_custom_call.1} parent=1 // pred_region
      _
    $region9: #{tpu_custom_call.1} parent=1 // pred_fallthru
      _
    // Predicated region
    $region10: #{tpu_custom_call.1} parent=1 // pred_check
      _
    $region11: #{tpu_custom_call.1} parent=1 // pred_check_branch
      %25 = sbr.rel (0) target = $region13
    $region12: #{tpu_custom_call.1} parent=1 // pred_region
      _
    $region13: #{tpu_custom_call.1} parent=1 // pred_fallthru
      _
    // Predicated region
    $region14: #{tpu_custom_call.1} parent=1 // pred_check
      _
    $region15: #{tpu_custom_call.1} parent=1 // pred_check_branch
      %27 = sbr.rel (0) target = $region17
    $region16: #{tpu_custom_call.1} parent=1 // pred_region
      %28 = dma.done [#allocation3], 256
    $region17: #{tpu_custom_call.1} parent=1 // pred_fallthru
      _
    %v29 = vld [vmem:[#allocation2] sm:$0xff]
    %v30 = vld [vmem:[#allocation2 + $0x8] sm:$0xff]
    %vm31 = vcmask 392192
    %v32 = vsel %vm31, %v29, 0.0
    %33 = vadd.xlane.f32.xlu0 %v32
    %v34 = vpop.xlane.xlu0 %33
    %v35 = vsel %vm31, %v30, 0.0
    %36 = vadd.xlane.f32.xlu0 %v35
    %v37 = vpop.xlane.xlu0 %36
    %v38 = vrcp.pop 48.0
    %v39 = vmul.f32 %v34, %v38
    %v40 = vmul.f32 %v37, %v38
    %v41 = vmul.f32 %v29, %v29
    %v42 = vmul.f32 %v30, %v30
    %v43 = vsel %vm31, %v41, 0.0
    %44 = vadd.xlane.f32.xlu0 %v43
    %v45 = vpop.xlane.xlu0 %44
    %v46 = vsel %vm31, %v42, 0.0
    %47 = vadd.xlane.f32.xlu0 %v46
    %v48 = vpop.xlane.xlu0 %47
    %v49 = vmul.f32 %v45, %v38
    %v50 = vmul.f32 %v48, %v38
    %v51 = vmul.f32 %v39, %v39
    %v52 = vmul.f32 %v40, %v40
    %v53 = vsub.f32 %v49, %v51
    %v54 = vsub.f32 %v50, %v52
    %v55 = vadd.f32 %v53, 1e-05
    %v56 = vadd.f32 %v54, 1e-05
    %v57 = vrsqrt.pop %v55
    %v58 = vrsqrt.pop %v56
    %v59 = vsub.f32 %v29, %v39
    %v60 = vsub.f32 %v30, %v40
    %v61 = vmul.f32 %v59, %v57
    %v62 = vmul.f32 %v60, %v58
    %v63 = vld [vmem:[%s1] sm:$0x1]
    %v65 = vlaneseq
    %v66 = vshrl.u32 %v65, 7
    %v67 = vsub.s32 0, %v66
    %v68 = vrot.slane %v63, %v67
    %v70 = vmul.f32 %v61, %v68
    %v71 = vmul.f32 %v62, %v68
    %v72 = vld [vmem:[%s2] sm:$0x1]
    %v74 = vlaneseq
    %v75 = vshrl.u32 %v74, 7
    %v76 = vsub.s32 0, %v75
    %v77 = vrot.slane %v72, %v76
    %v79 = vadd.f32 %v70, %v77
    %v80 = vadd.f32 %v71, %v77
    %81 = vst.msk [vmem:[#allocation5] sm:$0xff] %vm31, %v79
    %82 = vst.msk [vmem:[#allocation5 + $0x8] sm:$0xff] %vm31, %v80
    // Predicated region
    $region18: #{tpu_custom_call.1} parent=1 // pred_check
      _
    $region19: #{tpu_custom_call.1} parent=1 // pred_check_branch
      %84 = sbr.rel (0) target = $region21
    $region20: #{tpu_custom_call.1} parent=1 // pred_region
      %s86 = ssub.s32 256, 256
      %87 = vsyncadd [#allocation4], %s86
      %s88 = sshll.u32 [#allocation5], 4
      %s89 = int_to_ptr.vmem [resolvable:$true] %s88
      %94 = dma.vmem_to_hbm [thread:$0]  %s89, 256, %s3, [#allocation4], 128, 128, 8
    $region21: #{tpu_custom_call.1} parent=1 // pred_fallthru
      _
    // Predicated region
    $region22: #{tpu_custom_call.1} parent=1 // pred_check
      _
    $region23: #{tpu_custom_call.1} parent=1 // pred_check_branch
      %96 = sbr.rel (0) target = $region25
    $region24: #{tpu_custom_call.1} parent=1 // pred_region
      %97 = dma.done [#allocation4], 256
    $region25: #{tpu_custom_call.1} parent=1 // pred_fallthru
      _
    %98 = vsyncpa [#allocation3], 1
    %99 = vsyncpa [#allocation4], 1

</llo_original>
